<compile_context>
chip_gen: v6e
topology: v6e:2x2x1
jax: 0.10.0
libtpu: 0.0.40
codegen_flags: <defaults>
</compile_context>

<pallas_src>
import functools

import jax
import jax.numpy as jnp
from jax.experimental import pallas as pl
from jax.experimental.pallas import tpu as pltpu

_LOGITS_PAD = 128   # lane-dense logits width (fc4 padded 10 -> 128)
_NEG_INF = -1e30    # pad-lane bias: exp(pad - max) is exactly 0 in f32


def _round_up(n, m):
    return ((n + m - 1) // m) * m


def _mlp_kernel(x_ref,
                w1_ref, b1_ref,
                w2_ref, b2_ref,
                w3_ref, b3_ref,
                w4_ref, b4_ref,
                out_ref):
    """Whole forward pass for one batch tile: 4 MXU matmuls, VPU/EUP epilogue."""
    # In-kernel f32 -> bf16 cast (rides spare VALU slots; MXU still sees bf16).
    x = x_ref[...].astype(jnp.bfloat16)                                 # (TILE_B, 784)

    # fc1 + ReLU
    h1 = jnp.dot(x, w1_ref[...], preferred_element_type=jnp.float32) + b1_ref[...]
    h1 = jnp.maximum(h1, 0.0).astype(jnp.bfloat16)                      # (TILE_B, 256)

    # fc2 + ReLU
    h2 = jnp.dot(h1, w2_ref[...], preferred_element_type=jnp.float32) + b2_ref[...]
    h2 = jnp.maximum(h2, 0.0).astype(jnp.bfloat16)                      # (TILE_B, 256)

    # fc3 + ReLU
    h3 = jnp.dot(h2, w3_ref[...], preferred_element_type=jnp.float32) + b3_ref[...]
    h3 = jnp.maximum(h3, 0.0).astype(jnp.bfloat16)                      # (TILE_B, 64)

    # fc4 (lane-dense padded logits, f32).  Pad lanes get bias -1e30 so their
    # exp() contribution below is exactly 0 and lanes 0-9 match the 10-wide result.
    logits = jnp.dot(h3, w4_ref[...], preferred_element_type=jnp.float32) + b4_ref[...]
    # (TILE_B, 128)

    # Numerically stable log_softmax in f32 (pad lanes do not change max/sum).
    m = jnp.max(logits, axis=1, keepdims=True)
    shifted = logits - m
    lse = jnp.log(jnp.sum(jnp.exp(shifted), axis=1, keepdims=True))
    out_ref[...] = shifted - lse


@functools.partial(jax.jit, static_argnames=("tile_b",))
def mlpnet_forward(x_nchw, params, tile_b=1024):
    """x_nchw: (B, 1, 28, 28) float32, NCHW like the PyTorch module."""
    b = x_nchw.shape[0]
    # torch.flatten(x, 1) -> (B, 784).  Stays f32: the bf16 cast is done in-kernel.
    x_flat = x_nchw.reshape(b, -1)

    (w1, b1), (w2, b2), (w3, b3), (w4, b4) = params
    # Matmul weights in bf16 (f32 accumulation happens inside the kernel).
    w1b = w1.astype(jnp.bfloat16)
    w2b = w2.astype(jnp.bfloat16)
    w3b = w3.astype(jnp.bfloat16)
    # fc4 padded to 128 lane-dense outputs: zero weight columns, -1e30 bias in pad lanes.
    w4p = jnp.zeros((64, _LOGITS_PAD), jnp.bfloat16).at[:, :10].set(w4.astype(jnp.bfloat16))
    b4p = jnp.full((1, _LOGITS_PAD), _NEG_INF, jnp.float32).at[:, :10].set(b4)

    # Batch tiling.  No jnp.pad: the ragged last block (if any) is masked by Pallas.
    tile = min(tile_b, _round_up(b, 8))
    grid_n = pl.cdiv(b, tile)
    if grid_n < 2 and b > 8:
        # Guarantee >= 2 grid steps so both v7x TensorCores get work.
        tile = _round_up((b + 1) // 2, 8)
        grid_n = pl.cdiv(b, tile)

    x_spec = pl.BlockSpec((tile, 784), lambda i: (i, 0))
    out_spec = pl.BlockSpec((tile, _LOGITS_PAD), lambda i: (i, 0))
    # Weights/biases: constant index_map -> loaded once, VMEM-resident across steps.
    w1_spec = pl.BlockSpec((784, 256), lambda i: (0, 0))
    b1_spec = pl.BlockSpec((1, 256), lambda i: (0, 0))
    w2_spec = pl.BlockSpec((256, 256), lambda i: (0, 0))
    b2_spec = pl.BlockSpec((1, 256), lambda i: (0, 0))
    w3_spec = pl.BlockSpec((256, 64), lambda i: (0, 0))
    b3_spec = pl.BlockSpec((1, 64), lambda i: (0, 0))
    w4_spec = pl.BlockSpec((64, _LOGITS_PAD), lambda i: (0, 0))
    b4_spec = pl.BlockSpec((1, _LOGITS_PAD), lambda i: (0, 0))

    out_wide = pl.pallas_call(
        _mlp_kernel,
        out_shape=jax.ShapeDtypeStruct((b, _LOGITS_PAD), jnp.float32),
        grid=(grid_n,),
        in_specs=[x_spec,
                  w1_spec, b1_spec,
                  w2_spec, b2_spec,
                  w3_spec, b3_spec,
                  w4_spec, b4_spec],
        out_specs=out_spec,
        compiler_params=pltpu.CompilerParams(
            dimension_semantics=("parallel",)),
    )(x_flat, w1b, b1, w2b, b2, w3b, b3, w4p, b4p)

    # Drop the 118 lane-dense pad columns.
    return out_wide[:, :10]


def init_params(key):
    """Deterministic init mimicking nn.Linear shapes.

    PyTorch stores Linear weights as (out, in) and computes x @ W.T + b.
    We pre-transpose so the kernel weights are (in, out).  Biases are (1, out)
    2-D arrays for TPU-friendly layouts.
    """
    dims = [(784, 256), (256, 256), (256, 64), (64, 10)]
    params = []
    for (fan_in, fan_out) in dims:
        key, kw, kb = jax.random.split(key, 3)
        bound = 1.0 / jnp.sqrt(fan_in)
        w = jax.random.uniform(kw, (fan_in, fan_out), jnp.float32, -bound, bound)
        b = jax.random.uniform(kb, (1, fan_out), jnp.float32, -bound, bound)
        params.append((w, b))
    return tuple(params)


def _reference_forward(x_nchw, params):
    """Pure-JAX f32 reference matching the PyTorch module."""
    x = x_nchw.reshape(x_nchw.shape[0], -1)
    (w1, b1), (w2, b2), (w3, b3), (w4, b4) = params
    h = jnp.maximum(x @ w1 + b1, 0.0)
    h = jnp.maximum(h @ w2 + b2, 0.0)
    h = jnp.maximum(h @ w3 + b3, 0.0)
    logits = h @ w4 + b4
    return jax.nn.log_softmax(logits, axis=1)


if __name__ == "__main__":
    key = jax.random.PRNGKey(0)
    key, kx, kx2 = jax.random.split(key, 3)
    params = init_params(key)

    # Small MNIST-like batch: (B, C, H, W) = (8, 1, 28, 28) -> flattened to 784 features.
    x = jax.random.normal(kx, (8, 1, 28, 28), dtype=jnp.float32)
    out = jax.block_until_ready(mlpnet_forward(x, params))
    ref = _reference_forward(x, params)
    assert out.shape == (8, 10)
    # bf16 matmul operands with f32 accumulation -> loosened tolerance vs f32 reference.
    assert jnp.allclose(out, ref, atol=3e-2, rtol=3e-2), "Pallas output mismatch vs reference (B=8)"

    # Ragged batch: exercises the cdiv grid (masked last block) and the >=2-step path.
    x2 = jax.random.normal(kx2, (300, 1, 28, 28), dtype=jnp.float32)
    out2 = jax.block_until_ready(mlpnet_forward(x2, params))
    ref2 = _reference_forward(x2, params)
    assert out2.shape == (300, 10)
    assert jnp.allclose(out2, ref2, atol=3e-2, rtol=3e-2), "Pallas output mismatch vs reference (B=300)"

    print("KERNEL_OK")
</pallas_src>

<mosaic_0001>
module attributes {stable_mosaic.version = 11 : i64} {
  func.func @_mlp_kernel(%arg0: i32, %arg1: memref<8x784xf32, #tpu.memory_space<vmem>>, %arg2: memref<784x256xbf16, #tpu.memory_space<vmem>>, %arg3: memref<1x256xf32, #tpu.memory_space<vmem>>, %arg4: memref<256x256xbf16, #tpu.memory_space<vmem>>, %arg5: memref<1x256xf32, #tpu.memory_space<vmem>>, %arg6: memref<256x64xbf16, #tpu.memory_space<vmem>>, %arg7: memref<1x64xf32, #tpu.memory_space<vmem>>, %arg8: memref<64x128xbf16, #tpu.memory_space<vmem>>, %arg9: memref<1x128xf32, #tpu.memory_space<vmem>>, %arg10: memref<8x128xf32, #tpu.memory_space<vmem>>) attributes {dimension_semantics = [#tpu.dimension_semantics<parallel>], iteration_bounds = array<i64: 1>, scalar_prefetch = 0 : i64, scratch_operands = 0 : i64, tpu.core_type = #tpu.core_type<tc>, window_params = [{transform_indices = @transform_0, window_bounds = array<i64: 8, 784>}, {pipeline_mode = #tpu.pipeline_mode<synchronous>, transform_indices = @transform_1, window_bounds = array<i64: 784, 256>}, {pipeline_mode = #tpu.pipeline_mode<synchronous>, transform_indices = @transform_2, window_bounds = array<i64: 1, 256>}, {pipeline_mode = #tpu.pipeline_mode<synchronous>, transform_indices = @transform_3, window_bounds = array<i64: 256, 256>}, {pipeline_mode = #tpu.pipeline_mode<synchronous>, transform_indices = @transform_4, window_bounds = array<i64: 1, 256>}, {pipeline_mode = #tpu.pipeline_mode<synchronous>, transform_indices = @transform_5, window_bounds = array<i64: 256, 64>}, {pipeline_mode = #tpu.pipeline_mode<synchronous>, transform_indices = @transform_6, window_bounds = array<i64: 1, 64>}, {pipeline_mode = #tpu.pipeline_mode<synchronous>, transform_indices = @transform_7, window_bounds = array<i64: 64, 128>}, {pipeline_mode = #tpu.pipeline_mode<synchronous>, transform_indices = @transform_8, window_bounds = array<i64: 1, 128>}, {transform_indices = @transform_9, window_bounds = array<i64: 8, 128>}]} {
    %c0 = arith.constant 0 : index
    %c0_0 = arith.constant 0 : index
    %0 = vector.load %arg1[%c0, %c0_0] : memref<8x784xf32, #tpu.memory_space<vmem>>, vector<8x784xf32>
    %1 = arith.truncf %0 : vector<8x784xf32> to vector<8x784xbf16>
    %c0_1 = arith.constant 0 : index
    %c0_2 = arith.constant 0 : index
    %2 = vector.load %arg2[%c0_1, %c0_2] : memref<784x256xbf16, #tpu.memory_space<vmem>>, vector<784x256xbf16>
    %cst = arith.constant dense<0.000000e+00> : vector<8x256xf32>
    %3 = tpu.matmul %1, %2, %cst {dimension_numbers = #tpu.dot_dimension_numbers<[1], [0], [0], [1], [0, 0, 1, 1], [], []>} : vector<8x784xbf16>, vector<784x256xbf16>, vector<8x256xf32> -> vector<8x256xf32>
    %c0_3 = arith.constant 0 : index
    %c0_4 = arith.constant 0 : index
    %4 = vector.load %arg3[%c0_3, %c0_4] : memref<1x256xf32, #tpu.memory_space<vmem>>, vector<1x256xf32>
    %5 = vector.broadcast %4 : vector<1x256xf32> to vector<8x256xf32>
    %6 = arith.addf %3, %5 : vector<8x256xf32>
    %cst_5 = arith.constant 0.000000e+00 : f32
    %7 = vector.broadcast %cst_5 : f32 to vector<8x256xf32>
    %8 = arith.maximumf %6, %7 : vector<8x256xf32>
    %9 = arith.truncf %8 : vector<8x256xf32> to vector<8x256xbf16>
    %c0_6 = arith.constant 0 : index
    %c0_7 = arith.constant 0 : index
    %10 = vector.load %arg4[%c0_6, %c0_7] : memref<256x256xbf16, #tpu.memory_space<vmem>>, vector<256x256xbf16>
    %cst_8 = arith.constant dense<0.000000e+00> : vector<8x256xf32>
    %11 = tpu.matmul %9, %10, %cst_8 {dimension_numbers = #tpu.dot_dimension_numbers<[1], [0], [0], [1], [0, 0, 1, 1], [], []>} : vector<8x256xbf16>, vector<256x256xbf16>, vector<8x256xf32> -> vector<8x256xf32>
    %c0_9 = arith.constant 0 : index
    %c0_10 = arith.constant 0 : index
    %12 = vector.load %arg5[%c0_9, %c0_10] : memref<1x256xf32, #tpu.memory_space<vmem>>, vector<1x256xf32>
    %13 = vector.broadcast %12 : vector<1x256xf32> to vector<8x256xf32>
    %14 = arith.addf %11, %13 : vector<8x256xf32>
    %cst_11 = arith.constant 0.000000e+00 : f32
    %15 = vector.broadcast %cst_11 : f32 to vector<8x256xf32>
    %16 = arith.maximumf %14, %15 : vector<8x256xf32>
    %17 = arith.truncf %16 : vector<8x256xf32> to vector<8x256xbf16>
    %c0_12 = arith.constant 0 : index
    %c0_13 = arith.constant 0 : index
    %18 = vector.load %arg6[%c0_12, %c0_13] : memref<256x64xbf16, #tpu.memory_space<vmem>>, vector<256x64xbf16>
    %cst_14 = arith.constant dense<0.000000e+00> : vector<8x64xf32>
    %19 = tpu.matmul %17, %18, %cst_14 {dimension_numbers = #tpu.dot_dimension_numbers<[1], [0], [0], [1], [0, 0, 1, 1], [], []>} : vector<8x256xbf16>, vector<256x64xbf16>, vector<8x64xf32> -> vector<8x64xf32>
    %c0_15 = arith.constant 0 : index
    %c0_16 = arith.constant 0 : index
    %20 = vector.load %arg7[%c0_15, %c0_16] : memref<1x64xf32, #tpu.memory_space<vmem>>, vector<1x64xf32>
    %21 = vector.broadcast %20 : vector<1x64xf32> to vector<8x64xf32>
    %22 = arith.addf %19, %21 : vector<8x64xf32>
    %cst_17 = arith.constant 0.000000e+00 : f32
    %23 = vector.broadcast %cst_17 : f32 to vector<8x64xf32>
    %24 = arith.maximumf %22, %23 : vector<8x64xf32>
    %25 = arith.truncf %24 : vector<8x64xf32> to vector<8x64xbf16>
    %c0_18 = arith.constant 0 : index
    %c0_19 = arith.constant 0 : index
    %26 = vector.load %arg8[%c0_18, %c0_19] : memref<64x128xbf16, #tpu.memory_space<vmem>>, vector<64x128xbf16>
    %cst_20 = arith.constant dense<0.000000e+00> : vector<8x128xf32>
    %27 = tpu.matmul %25, %26, %cst_20 {dimension_numbers = #tpu.dot_dimension_numbers<[1], [0], [0], [1], [0, 0, 1, 1], [], []>} : vector<8x64xbf16>, vector<64x128xbf16>, vector<8x128xf32> -> vector<8x128xf32>
    %c0_21 = arith.constant 0 : index
    %c0_22 = arith.constant 0 : index
    %28 = vector.load %arg9[%c0_21, %c0_22] : memref<1x128xf32, #tpu.memory_space<vmem>>, vector<1x128xf32>
    %29 = vector.broadcast %28 : vector<1x128xf32> to vector<8x128xf32>
    %30 = arith.addf %27, %29 : vector<8x128xf32>
    %cst_23 = arith.constant dense<0xFF800000> : vector<8xf32>
    %31 = vector.multi_reduction <maximumf>, %30, %cst_23 [1] : vector<8x128xf32> to vector<8xf32>
    %32 = vector.shape_cast %31 : vector<8xf32> to vector<8x1xf32>
    %33 = vector.broadcast %32 : vector<8x1xf32> to vector<8x128xf32>
    %34 = arith.subf %30, %33 : vector<8x128xf32>
    %35 = math.exp %34 : vector<8x128xf32>
    %cst_24 = arith.constant dense<0.000000e+00> : vector<8xf32>
    %36 = vector.multi_reduction <add>, %35, %cst_24 [1] : vector<8x128xf32> to vector<8xf32>
    %37 = vector.shape_cast %36 : vector<8xf32> to vector<8x1xf32>
    %38 = math.log %37 : vector<8x1xf32>
    %39 = vector.broadcast %38 : vector<8x1xf32> to vector<8x128xf32>
    %40 = arith.subf %34, %39 : vector<8x128xf32>
    %c0_25 = arith.constant 0 : index
    %c0_26 = arith.constant 0 : index
    %41 = vector.load %arg10[%c0_25, %c0_26] : memref<8x128xf32, #tpu.memory_space<vmem>>, vector<8x128xf32>
    tpu.vector_store %arg10[%c0_25, %c0_26], %40 {strides = array<i32>} : memref<8x128xf32, #tpu.memory_space<vmem>>, vector<8x128xf32>,
    return
  }
  func.func @transform_0(%arg0: i32) -> (i32, i32) {
    %c0_i32 = arith.constant 0 : i32
    %c0_i32_0 = arith.constant 0 : i32
    return %arg0, %c0_i32 : i32, i32
  }
  func.func @transform_1(%arg0: i32) -> (i32, i32) {
    %c0_i32 = arith.constant 0 : i32
    %c0_i32_0 = arith.constant 0 : i32
    %c0_i32_1 = arith.constant 0 : i32
    return %c0_i32, %c0_i32_0 : i32, i32
  }
  func.func @transform_2(%arg0: i32) -> (i32, i32) {
    %c0_i32 = arith.constant 0 : i32
    %c0_i32_0 = arith.constant 0 : i32
    %c0_i32_1 = arith.constant 0 : i32
    return %c0_i32, %c0_i32_0 : i32, i32
  }
  func.func @transform_3(%arg0: i32) -> (i32, i32) {
    %c0_i32 = arith.constant 0 : i32
    %c0_i32_0 = arith.constant 0 : i32
    %c0_i32_1 = arith.constant 0 : i32
    return %c0_i32, %c0_i32_0 : i32, i32
  }
  func.func @transform_4(%arg0: i32) -> (i32, i32) {
    %c0_i32 = arith.constant 0 : i32
    %c0_i32_0 = arith.constant 0 : i32
    %c0_i32_1 = arith.constant 0 : i32
    return %c0_i32, %c0_i32_0 : i32, i32
  }
  func.func @transform_5(%arg0: i32) -> (i32, i32) {
    %c0_i32 = arith.constant 0 : i32
    %c0_i32_0 = arith.constant 0 : i32
    %c0_i32_1 = arith.constant 0 : i32
    return %c0_i32, %c0_i32_0 : i32, i32
  }
  func.func @transform_6(%arg0: i32) -> (i32, i32) {
    %c0_i32 = arith.constant 0 : i32
    %c0_i32_0 = arith.constant 0 : i32
    %c0_i32_1 = arith.constant 0 : i32
    return %c0_i32, %c0_i32_0 : i32, i32
  }
  func.func @transform_7(%arg0: i32) -> (i32, i32) {
    %c0_i32 = arith.constant 0 : i32
    %c0_i32_0 = arith.constant 0 : i32
    %c0_i32_1 = arith.constant 0 : i32
    return %c0_i32, %c0_i32_0 : i32, i32
  }
  func.func @transform_8(%arg0: i32) -> (i32, i32) {
    %c0_i32 = arith.constant 0 : i32
    %c0_i32_0 = arith.constant 0 : i32
    %c0_i32_1 = arith.constant 0 : i32
    return %c0_i32, %c0_i32_0 : i32, i32
  }
  func.func @transform_9(%arg0: i32) -> (i32, i32) {
    %c0_i32 = arith.constant 0 : i32
    %c0_i32_0 = arith.constant 0 : i32
    return %arg0, %c0_i32 : i32, i32
  }
}

</mosaic_0001>

<llo_original>
// kernel: mlpnet_forward.1
$region0: #{mlpnet_forward.1}
  #allocation0 [shape = 'u32[]', space=smem, size = 0x4, offset = 0x4, fixed_abs, tag = 'smem constant byte address 0x4 - core index']
  #allocation1 [shape = 'u32[144,128]{1,0:T(1,128)}', space=vmem, size = 0x12000, scoped, tag = 'internal scratch']
  %s0 = inlined_call_operand.vmem [shape: f32[8,784], index: 0, kind: input, shape index: {}]
  %s1 = inlined_call_operand.vmem [shape: bf16[784,256], index: 1, kind: input, shape index: {}]
  %s2 = inlined_call_operand.vmem [shape: f32[1,256], index: 2, kind: input, shape index: {}]
  %s3 = inlined_call_operand.vmem [shape: bf16[256,256], index: 3, kind: input, shape index: {}]
  %s4 = inlined_call_operand.vmem [shape: f32[1,256], index: 4, kind: input, shape index: {}]
  %s5 = inlined_call_operand.vmem [shape: bf16[256,64], index: 5, kind: input, shape index: {}]
  %s6 = inlined_call_operand.vmem [shape: f32[1,64], index: 6, kind: input, shape index: {}]
  %s7 = inlined_call_operand.vmem [shape: bf16[64,128], index: 7, kind: input, shape index: {}]
  %s8 = inlined_call_operand.vmem [shape: f32[1,128], index: 8, kind: input, shape index: {}]
  %s9 = inlined_call_operand.hbm [shape: f32[8,128], index: 9, kind: output, shape index: {}]
  %s10 = sld [smem:[#allocation0]]
  $region46: #{mlpnet_forward.1} parent=0
    _
  %s12 = ssub.s32 1, %s10
  %s13 = scalar_select 0, %s12, %s10
  $region1: #{mlpnet_forward.1} parent=0
    #allocation2 [shape = 'u8[4096]{0}', space=vmem, size = 0x1000, scoped, tag = 'output window, operand 0, single buffered']
    #allocation3 [shape = 's32[1]{0}', space=sflag, size = 0x4, scoped, tag = 'scoped memory for mlpnet_forward.1']
    %14 = vsyncpa [#allocation3], 0
    // Predicated region
    $region2: #{mlpnet_forward.1} parent=1 // pred_check
      _
    $region3: #{mlpnet_forward.1} parent=1 // pred_check_branch
      %16 = sbr.rel (0) target = $region5
    $region4: #{mlpnet_forward.1} parent=1 // pred_region
      _
    $region5: #{mlpnet_forward.1} parent=1 // pred_fallthru
      _
    // Predicated region
    $region6: #{mlpnet_forward.1} parent=1 // pred_check
      _
    $region7: #{mlpnet_forward.1} parent=1 // pred_check_branch
      %18 = sbr.rel (0) target = $region9
    $region8: #{mlpnet_forward.1} parent=1 // pred_region
      _
    $region9: #{mlpnet_forward.1} parent=1 // pred_fallthru
      _
    // Predicated region
    $region10: #{mlpnet_forward.1} parent=1 // pred_check
      _
    $region11: #{mlpnet_forward.1} parent=1 // pred_check_branch
      %20 = sbr.rel (0) target = $region13
    $region12: #{mlpnet_forward.1} parent=1 // pred_region
      _
    $region13: #{mlpnet_forward.1} parent=1 // pred_fallthru
      _
    // Predicated region
    $region14: #{mlpnet_forward.1} parent=1 // pred_check
      _
    $region15: #{mlpnet_forward.1} parent=1 // pred_check_branch
      %22 = sbr.rel (0) target = $region17
    $region16: #{mlpnet_forward.1} parent=1 // pred_region
      _
    $region17: #{mlpnet_forward.1} parent=1 // pred_fallthru
      _
    // Predicated region
    $region18: #{mlpnet_forward.1} parent=1 // pred_check
      _
    $region19: #{mlpnet_forward.1} parent=1 // pred_check_branch
      %24 = sbr.rel (0) target = $region21
    $region20: #{mlpnet_forward.1} parent=1 // pred_region
      _
    $region21: #{mlpnet_forward.1} parent=1 // pred_fallthru
      _
    // Predicated region
    $region22: #{mlpnet_forward.1} parent=1 // pred_check
      _
    $region23: #{mlpnet_forward.1} parent=1 // pred_check_branch
      %26 = sbr.rel (0) target = $region25
    $region24: #{mlpnet_forward.1} parent=1 // pred_region
      _
    $region25: #{mlpnet_forward.1} parent=1 // pred_fallthru
      _
    // Predicated region
    $region26: #{mlpnet_forward.1} parent=1 // pred_check
      _
    $region27: #{mlpnet_forward.1} parent=1 // pred_check_branch
      %28 = sbr.rel (0) target = $region29
    $region28: #{mlpnet_forward.1} parent=1 // pred_region
      _
    $region29: #{mlpnet_forward.1} parent=1 // pred_fallthru
      _
    // Predicated region
    $region30: #{mlpnet_forward.1} parent=1 // pred_check
      _
    $region31: #{mlpnet_forward.1} parent=1 // pred_check_branch
      %30 = sbr.rel (0) target = $region33
    $region32: #{mlpnet_forward.1} parent=1 // pred_region
      _
    $region33: #{mlpnet_forward.1} parent=1 // pred_fallthru
      _
    // Predicated region
    $region34: #{mlpnet_forward.1} parent=1 // pred_check
      _
    $region35: #{mlpnet_forward.1} parent=1 // pred_check_branch
      %32 = sbr.rel (0) target = $region37
    $region36: #{mlpnet_forward.1} parent=1 // pred_region
      _
    $region37: #{mlpnet_forward.1} parent=1 // pred_fallthru
      _
    %v34 = vld [vmem:[%s0] sm:$0xff]
    %v35 = vld [vmem:[%s0 + $0x8] sm:$0xff]
    %v36 = vld [vmem:[%s0 + $0x10] sm:$0xff]
    %v37 = vld [vmem:[%s0 + $0x18] sm:$0xff]
    %v38 = vld [vmem:[%s0 + $0x20] sm:$0xff]
    %v39 = vld [vmem:[%s0 + $0x28] sm:$0xff]
    %v40 = vld [vmem:[%s0 + $0x30] sm:$0xff]
    %v41 = vpack.c.bf16 %v34, %v34
    %v42 = vpack.c.bf16 %v35, %v35
    %v43 = vpack.c.bf16 %v36, %v36
    %v44 = vpack.c.bf16 %v37, %v37
    %v45 = vpack.c.bf16 %v38, %v38
    %v46 = vpack.c.bf16 %v39, %v39
    %v47 = vpack.c.bf16 %v40, %v40
    %v48 = vld [vmem:[%s1] sm:$0xff]
    %v49 = vld [vmem:[%s1 + $0x8] sm:$0xff]
    %v50 = vld [vmem:[%s1 + $0x10] sm:$0xff]
    %v51 = vld [vmem:[%s1 + $0x18] sm:$0xff]
    %v52 = vld [vmem:[%s1 + $0x20] sm:$0xff]
    %v53 = vld [vmem:[%s1 + $0x28] sm:$0xff]
    %v54 = vld [vmem:[%s1 + $0x30] sm:$0xff]
    %v55 = vld [vmem:[%s1 + $0x38] sm:$0xff]
    %v56 = vld [vmem:[%s1 + $0x40] sm:$0xff]
    %v57 = vld [vmem:[%s1 + $0x48] sm:$0xff]
    %v58 = vld [vmem:[%s1 + $0x50] sm:$0xff]
    %v59 = vld [vmem:[%s1 + $0x58] sm:$0xff]
    %v60 = vld [vmem:[%s1 + $0x60] sm:$0xff]
    %v61 = vld [vmem:[%s1 + $0x68] sm:$0xff]
    %v62 = vld [vmem:[%s1 + $0x70] sm:$0xff]
    %v63 = vld [vmem:[%s1 + $0x78] sm:$0xff]
    %v64 = vld [vmem:[%s1 + $0x80] sm:$0xff]
    %v65 = vld [vmem:[%s1 + $0x88] sm:$0xff]
    %v66 = vld [vmem:[%s1 + $0x90] sm:$0xff]
    %v67 = vld [vmem:[%s1 + $0x98] sm:$0xff]
    %v68 = vld [vmem:[%s1 + $0xa0] sm:$0xff]
    %v69 = vld [vmem:[%s1 + $0xa8] sm:$0xff]
    %v70 = vld [vmem:[%s1 + $0xb0] sm:$0xff]
    %v71 = vld [vmem:[%s1 + $0xb8] sm:$0xff]
    %v72 = vld [vmem:[%s1 + $0xc0] sm:$0xff]
    %v73 = vld [vmem:[%s1 + $0xc8] sm:$0xff]
    %v74 = vld [vmem:[%s1 + $0xd0] sm:$0xff]
    %v75 = vld [vmem:[%s1 + $0xd8] sm:$0xff]
    %v76 = vld [vmem:[%s1 + $0xe0] sm:$0xff]
    %v77 = vld [vmem:[%s1 + $0xe8] sm:$0xff]
    %v78 = vld [vmem:[%s1 + $0xf0] sm:$0xff]
    %v79 = vld [vmem:[%s1 + $0xf8] sm:$0xff]
    %v80 = vld [vmem:[%s1 + $0x100] sm:$0xff]
    %v81 = vld [vmem:[%s1 + $0x108] sm:$0xff]
    %v82 = vld [vmem:[%s1 + $0x110] sm:$0xff]
    %v83 = vld [vmem:[%s1 + $0x118] sm:$0xff]
    %v84 = vld [vmem:[%s1 + $0x120] sm:$0xff]
    %v85 = vld [vmem:[%s1 + $0x128] sm:$0xff]
    %v86 = vld [vmem:[%s1 + $0x130] sm:$0xff]
    %v87 = vld [vmem:[%s1 + $0x138] sm:$0xff]
    %v88 = vld [vmem:[%s1 + $0x140] sm:$0xff]
    %v89 = vld [vmem:[%s1 + $0x148] sm:$0xff]
    %v90 = vld [vmem:[%s1 + $0x150] sm:$0xff]
    %v91 = vld [vmem:[%s1 + $0x158] sm:$0xff]
    %v92 = vld [vmem:[%s1 + $0x160] sm:$0xff]
    %v93 = vld [vmem:[%s1 + $0x168] sm:$0xff]
    %v94 = vld [vmem:[%s1 + $0x170] sm:$0xff]
    %v95 = vld [vmem:[%s1 + $0x178] sm:$0xff]
    %v96 = vld [vmem:[%s1 + $0x180] sm:$0xff]
    %v97 = vld [vmem:[%s1 + $0x188] sm:$0xff]
    %v98 = vld [vmem:[%s1 + $0x190] sm:$0xff]
    %v99 = vld [vmem:[%s1 + $0x198] sm:$0xff]
    %v100 = vld [vmem:[%s1 + $0x1a0] sm:$0xff]
    %v101 = vld [vmem:[%s1 + $0x1a8] sm:$0xff]
    %v102 = vld [vmem:[%s1 + $0x1b0] sm:$0xff]
    %v103 = vld [vmem:[%s1 + $0x1b8] sm:$0xff]
    %v104 = vld [vmem:[%s1 + $0x1c0] sm:$0xff]
    %v105 = vld [vmem:[%s1 + $0x1c8] sm:$0xff]
    %v106 = vld [vmem:[%s1 + $0x1d0] sm:$0xff]
    %v107 = vld [vmem:[%s1 + $0x1d8] sm:$0xff]
    %v108 = vld [vmem:[%s1 + $0x1e0] sm:$0xff]
    %v109 = vld [vmem:[%s1 + $0x1e8] sm:$0xff]
    %v110 = vld [vmem:[%s1 + $0x1f0] sm:$0xff]
    %v111 = vld [vmem:[%s1 + $0x1f8] sm:$0xff]
    %v112 = vld [vmem:[%s1 + $0x200] sm:$0xff]
    %v113 = vld [vmem:[%s1 + $0x208] sm:$0xff]
    %v114 = vld [vmem:[%s1 + $0x210] sm:$0xff]
    %v115 = vld [vmem:[%s1 + $0x218] sm:$0xff]
    %v116 = vld [vmem:[%s1 + $0x220] sm:$0xff]
    %v117 = vld [vmem:[%s1 + $0x228] sm:$0xff]
    %v118 = vld [vmem:[%s1 + $0x230] sm:$0xff]
    %v119 = vld [vmem:[%s1 + $0x238] sm:$0xff]
    %v120 = vld [vmem:[%s1 + $0x240] sm:$0xff]
    %v121 = vld [vmem:[%s1 + $0x248] sm:$0xff]
    %v122 = vld [vmem:[%s1 + $0x250] sm:$0xff]
    %v123 = vld [vmem:[%s1 + $0x258] sm:$0xff]
    %v124 = vld [vmem:[%s1 + $0x260] sm:$0xff]
    %v125 = vld [vmem:[%s1 + $0x268] sm:$0xff]
    %v126 = vld [vmem:[%s1 + $0x270] sm:$0xff]
    %v127 = vld [vmem:[%s1 + $0x278] sm:$0xff]
    %v128 = vld [vmem:[%s1 + $0x280] sm:$0xff]
    %v129 = vld [vmem:[%s1 + $0x288] sm:$0xff]
    %v130 = vld [vmem:[%s1 + $0x290] sm:$0xff]
    %v131 = vld [vmem:[%s1 + $0x298] sm:$0xff]
    %v132 = vld [vmem:[%s1 + $0x2a0] sm:$0xff]
    %v133 = vld [vmem:[%s1 + $0x2a8] sm:$0xff]
    %v134 = vld [vmem:[%s1 + $0x2b0] sm:$0xff]
    %v135 = vld [vmem:[%s1 + $0x2b8] sm:$0xff]
    %v136 = vld [vmem:[%s1 + $0x2c0] sm:$0xff]
    %v137 = vld [vmem:[%s1 + $0x2c8] sm:$0xff]
    %v138 = vld [vmem:[%s1 + $0x2d0] sm:$0xff]
    %v139 = vld [vmem:[%s1 + $0x2d8] sm:$0xff]
    %v140 = vld [vmem:[%s1 + $0x2e0] sm:$0xff]
    %v141 = vld [vmem:[%s1 + $0x2e8] sm:$0xff]
    %v142 = vld [vmem:[%s1 + $0x2f0] sm:$0xff]
    %v143 = vld [vmem:[%s1 + $0x2f8] sm:$0xff]
    %v144 = vld [vmem:[%s1 + $0x300] sm:$0xff]
    %v145 = vld [vmem:[%s1 + $0x308] sm:$0xff]
    %v146 = vld [vmem:[%s2] sm:$0x3]
    %v148 = vlaneseq
    %v149 = vshrl.u32 %v148, 7
    %v150 = vsub.s32 0, %v149
    %v151 = vrot.slane %v146, %v150
    %v152 = vlaneseq
    %v153 = vshrl.u32 %v152, 7
    %v154 = vsub.s32 1, %v153
    %v155 = vrot.slane %v146, %v154
    %v256 = vunpack.c.l.b16 %v48
    %v257 = vunpack.c.h.b16 %v48
    %v258 = vunpack.c.l.b16 %v49
    %v259 = vunpack.c.h.b16 %v49
    %v260 = vunpack.c.l.b16 %v50
    %v261 = vunpack.c.h.b16 %v50
    %v262 = vunpack.c.l.b16 %v51
    %v263 = vunpack.c.h.b16 %v51
    %v264 = vunpack.c.l.b16 %v52
    %v265 = vunpack.c.h.b16 %v52
    %v266 = vunpack.c.l.b16 %v53
    %v267 = vunpack.c.h.b16 %v53
    %v268 = vunpack.c.l.b16 %v54
    %v269 = vunpack.c.h.b16 %v54
    %v270 = vunpack.c.l.b16 %v55
    %v271 = vunpack.c.h.b16 %v55
    %v272 = vunpack.c.l.b16 %v56
    %v273 = vunpack.c.h.b16 %v56
    %v274 = vunpack.c.l.b16 %v57
    %v275 = vunpack.c.h.b16 %v57
    %v276 = vunpack.c.l.b16 %v58
    %v277 = vunpack.c.h.b16 %v58
    %v278 = vunpack.c.l.b16 %v59
    %v279 = vunpack.c.h.b16 %v59
    %v280 = vunpack.c.l.b16 %v60
    %v281 = vunpack.c.h.b16 %v60
    %v282 = vunpack.c.l.b16 %v61
    %v283 = vunpack.c.h.b16 %v61
    %v284 = vunpack.c.l.b16 %v62
    %v285 = vunpack.c.h.b16 %v62
    %v286 = vunpack.c.l.b16 %v63
    %v287 = vunpack.c.h.b16 %v63
    %v288 = vunpack.c.l.b16 %v64
    %v289 = vunpack.c.h.b16 %v64
    %v290 = vunpack.c.l.b16 %v65
    %v291 = vunpack.c.h.b16 %v65
    %v292 = vunpack.c.l.b16 %v66
    %v293 = vunpack.c.h.b16 %v66
    %v294 = vunpack.c.l.b16 %v67
    %v295 = vunpack.c.h.b16 %v67
    %v296 = vunpack.c.l.b16 %v68
    %v297 = vunpack.c.h.b16 %v68
    %v298 = vunpack.c.l.b16 %v69
    %v299 = vunpack.c.h.b16 %v69
    %v300 = vunpack.c.l.b16 %v70
    %v301 = vunpack.c.h.b16 %v70
    %v302 = vunpack.c.l.b16 %v71
    %v303 = vunpack.c.h.b16 %v71
    %v304 = vunpack.c.l.b16 %v72
    %v305 = vunpack.c.h.b16 %v72
    %v306 = vunpack.c.l.b16 %v73
    %v307 = vunpack.c.h.b16 %v73
    %v308 = vunpack.c.l.b16 %v74
    %v309 = vunpack.c.h.b16 %v74
    %v310 = vunpack.c.l.b16 %v75
    %v311 = vunpack.c.h.b16 %v75
    %v312 = vunpack.c.l.b16 %v76
    %v313 = vunpack.c.h.b16 %v76
    %v314 = vunpack.c.l.b16 %v77
    %v315 = vunpack.c.h.b16 %v77
    %v316 = vunpack.c.l.b16 %v78
    %v317 = vunpack.c.h.b16 %v78
    %v318 = vunpack.c.l.b16 %v79
    %v319 = vunpack.c.h.b16 %v79
    %v320 = vunpack.c.l.b16 %v80
    %v321 = vunpack.c.h.b16 %v80
    %v322 = vunpack.c.l.b16 %v81
    %v323 = vunpack.c.h.b16 %v81
    %v324 = vunpack.c.l.b16 %v82
    %v325 = vunpack.c.h.b16 %v82
    %v326 = vunpack.c.l.b16 %v83
    %v327 = vunpack.c.h.b16 %v83
    %v328 = vunpack.c.l.b16 %v84
    %v329 = vunpack.c.h.b16 %v84
    %v330 = vunpack.c.l.b16 %v85
    %v331 = vunpack.c.h.b16 %v85
    %v332 = vunpack.c.l.b16 %v86
    %v333 = vunpack.c.h.b16 %v86
    %v334 = vunpack.c.l.b16 %v87
    %v335 = vunpack.c.h.b16 %v87
    %v336 = vunpack.c.l.b16 %v88
    %v337 = vunpack.c.h.b16 %v88
    %v338 = vunpack.c.l.b16 %v89
    %v339 = vunpack.c.h.b16 %v89
    %v340 = vunpack.c.l.b16 %v90
    %v341 = vunpack.c.h.b16 %v90
    %v342 = vunpack.c.l.b16 %v91
    %v343 = vunpack.c.h.b16 %v91
    %v344 = vunpack.c.l.b16 %v92
    %v345 = vunpack.c.h.b16 %v92
    %v346 = vunpack.c.l.b16 %v93
    %v347 = vunpack.c.h.b16 %v93
    %v348 = vunpack.c.l.b16 %v94
    %v349 = vunpack.c.h.b16 %v94
    %v350 = vunpack.c.l.b16 %v95
    %v351 = vunpack.c.h.b16 %v95
    %v352 = vunpack.c.l.b16 %v96
    %v353 = vunpack.c.h.b16 %v96
    %v354 = vunpack.c.l.b16 %v97
    %v355 = vunpack.c.h.b16 %v97
    %v356 = vunpack.c.l.b16 %v98
    %v357 = vunpack.c.h.b16 %v98
    %v358 = vunpack.c.l.b16 %v99
    %v359 = vunpack.c.h.b16 %v99
    %v360 = vunpack.c.l.b16 %v100
    %v361 = vunpack.c.h.b16 %v100
    %v362 = vunpack.c.l.b16 %v101
    %v363 = vunpack.c.h.b16 %v101
    %v364 = vunpack.c.l.b16 %v102
    %v365 = vunpack.c.h.b16 %v102
    %v366 = vunpack.c.l.b16 %v103
    %v367 = vunpack.c.h.b16 %v103
    %v368 = vunpack.c.l.b16 %v104
    %v369 = vunpack.c.h.b16 %v104
    %v370 = vunpack.c.l.b16 %v105
    %v371 = vunpack.c.h.b16 %v105
    %v372 = vunpack.c.l.b16 %v106
    %v373 = vunpack.c.h.b16 %v106
    %v374 = vunpack.c.l.b16 %v107
    %v375 = vunpack.c.h.b16 %v107
    %v376 = vunpack.c.l.b16 %v108
    %v377 = vunpack.c.h.b16 %v108
    %v378 = vunpack.c.l.b16 %v109
    %v379 = vunpack.c.h.b16 %v109
    %v380 = vunpack.c.l.b16 %v110
    %v381 = vunpack.c.h.b16 %v110
    %v382 = vunpack.c.l.b16 %v111
    %v383 = vunpack.c.h.b16 %v111
    %v384 = vunpack.c.l.b16 %v112
    %v385 = vunpack.c.h.b16 %v112
    %v386 = vunpack.c.l.b16 %v113
    %v387 = vunpack.c.h.b16 %v113
    %v388 = vunpack.c.l.b16 %v114
    %v389 = vunpack.c.h.b16 %v114
    %v390 = vunpack.c.l.b16 %v115
    %v391 = vunpack.c.h.b16 %v115
    %v392 = vunpack.c.l.b16 %v116
    %v393 = vunpack.c.h.b16 %v116
    %v394 = vunpack.c.l.b16 %v117
    %v395 = vunpack.c.h.b16 %v117
    %v396 = vunpack.c.l.b16 %v118
    %v397 = vunpack.c.h.b16 %v118
    %v398 = vunpack.c.l.b16 %v119
    %v399 = vunpack.c.h.b16 %v119
    %v400 = vunpack.c.l.b16 %v120
    %v401 = vunpack.c.h.b16 %v120
    %v402 = vunpack.c.l.b16 %v121
    %v403 = vunpack.c.h.b16 %v121
    %v404 = vunpack.c.l.b16 %v122
    %v405 = vunpack.c.h.b16 %v122
    %v406 = vunpack.c.l.b16 %v123
    %v407 = vunpack.c.h.b16 %v123
    %v408 = vunpack.c.l.b16 %v124
    %v409 = vunpack.c.h.b16 %v124
    %v410 = vunpack.c.l.b16 %v125
    %v411 = vunpack.c.h.b16 %v125
    %v412 = vunpack.c.l.b16 %v126
    %v413 = vunpack.c.h.b16 %v126
    %v414 = vunpack.c.l.b16 %v127
    %v415 = vunpack.c.h.b16 %v127
    %v416 = vunpack.c.l.b16 %v128
    %v417 = vunpack.c.h.b16 %v128
    %v418 = vunpack.c.l.b16 %v129
    %v419 = vunpack.c.h.b16 %v129
    %v420 = vunpack.c.l.b16 %v130
    %v421 = vunpack.c.h.b16 %v130
    %v422 = vunpack.c.l.b16 %v131
    %v423 = vunpack.c.h.b16 %v131
    %v424 = vunpack.c.l.b16 %v132
    %v425 = vunpack.c.h.b16 %v132
    %v426 = vunpack.c.l.b16 %v133
    %v427 = vunpack.c.h.b16 %v133
    %v428 = vunpack.c.l.b16 %v134
    %v429 = vunpack.c.h.b16 %v134
    %v430 = vunpack.c.l.b16 %v135
    %v431 = vunpack.c.h.b16 %v135
    %v432 = vunpack.c.l.b16 %v136
    %v433 = vunpack.c.h.b16 %v136
    %v434 = vunpack.c.l.b16 %v137
    %v435 = vunpack.c.h.b16 %v137
    %v436 = vunpack.c.l.b16 %v138
    %v437 = vunpack.c.h.b16 %v138
    %v438 = vunpack.c.l.b16 %v139
    %v439 = vunpack.c.h.b16 %v139
    %v440 = vunpack.c.l.b16 %v140
    %v441 = vunpack.c.h.b16 %v140
    %v442 = vunpack.c.l.b16 %v141
    %v443 = vunpack.c.h.b16 %v141
    %v444 = vunpack.c.l.b16 %v142
    %v445 = vunpack.c.h.b16 %v142
    %v446 = vunpack.c.l.b16 %v143
    %v447 = vunpack.c.h.b16 %v143
    %v448 = vunpack.c.l.b16 %v144
    %v449 = vunpack.c.h.b16 %v144
    %v450 = vunpack.c.l.b16 %v145
    %v451 = vunpack.c.h.b16 %v145
    %v452 = vpack.c.b16 %v258, %v256
    %v453 = vpack.c.b16 %v259, %v257
    %v454 = vpack.c.b16 %v262, %v260
    %v455 = vpack.c.b16 %v263, %v261
    %v456 = vpack.c.b16 %v266, %v264
    %v457 = vpack.c.b16 %v267, %v265
    %v458 = vpack.c.b16 %v270, %v268
    %v459 = vpack.c.b16 %v271, %v269
    %v460 = vpack.c.b16 %v274, %v272
    %v461 = vpack.c.b16 %v275, %v273
    %v462 = vpack.c.b16 %v278, %v276
    %v463 = vpack.c.b16 %v279, %v277
    %v464 = vpack.c.b16 %v282, %v280
    %v465 = vpack.c.b16 %v283, %v281
    %v466 = vpack.c.b16 %v286, %v284
    %v467 = vpack.c.b16 %v287, %v285
    %v468 = vpack.c.b16 %v290, %v288
    %v469 = vpack.c.b16 %v291, %v289
    %v470 = vpack.c.b16 %v294, %v292
    %v471 = vpack.c.b16 %v295, %v293
    %v472 = vpack.c.b16 %v298, %v296
    %v473 = vpack.c.b16 %v299, %v297
    %v474 = vpack.c.b16 %v302, %v300
    %v475 = vpack.c.b16 %v303, %v301
    %v476 = vpack.c.b16 %v306, %v304
    %v477 = vpack.c.b16 %v307, %v305
    %v478 = vpack.c.b16 %v310, %v308
    %v479 = vpack.c.b16 %v311, %v309
    %v480 = vpack.c.b16 %v314, %v312
    %v481 = vpack.c.b16 %v315, %v313
    %v482 = vpack.c.b16 %v318, %v316
    %v483 = vpack.c.b16 %v319, %v317
    %v484 = vpack.c.b16 %v322, %v320
    %v485 = vpack.c.b16 %v323, %v321
    %v486 = vpack.c.b16 %v326, %v324
    %v487 = vpack.c.b16 %v327, %v325
    %v488 = vpack.c.b16 %v330, %v328
    %v489 = vpack.c.b16 %v331, %v329
    %v490 = vpack.c.b16 %v334, %v332
    %v491 = vpack.c.b16 %v335, %v333
    %v492 = vpack.c.b16 %v338, %v336
    %v493 = vpack.c.b16 %v339, %v337
    %v494 = vpack.c.b16 %v342, %v340
    %v495 = vpack.c.b16 %v343, %v341
    %v496 = vpack.c.b16 %v346, %v344
    %v497 = vpack.c.b16 %v347, %v345
    %v498 = vpack.c.b16 %v350, %v348
    %v499 = vpack.c.b16 %v351, %v349
    %v500 = vpack.c.b16 %v354, %v352
    %v501 = vpack.c.b16 %v355, %v353
    %v502 = vpack.c.b16 %v358, %v356
    %v503 = vpack.c.b16 %v359, %v357
    %v504 = vpack.c.b16 %v362, %v360
    %v505 = vpack.c.b16 %v363, %v361
    %v506 = vpack.c.b16 %v366, %v364
    %v507 = vpack.c.b16 %v367, %v365
    %v508 = vpack.c.b16 %v370, %v368
    %v509 = vpack.c.b16 %v371, %v369
    %v510 = vpack.c.b16 %v374, %v372
    %v511 = vpack.c.b16 %v375, %v373
    %v512 = vpack.c.b16 %v378, %v376
    %v513 = vpack.c.b16 %v379, %v377
    %v514 = vpack.c.b16 %v382, %v380
    %v515 = vpack.c.b16 %v383, %v381
    %v516 = vpack.c.b16 %v386, %v384
    %v517 = vpack.c.b16 %v387, %v385
    %v518 = vpack.c.b16 %v390, %v388
    %v519 = vpack.c.b16 %v391, %v389
    %v520 = vpack.c.b16 %v394, %v392
    %v521 = vpack.c.b16 %v395, %v393
    %v522 = vpack.c.b16 %v398, %v396
    %v523 = vpack.c.b16 %v399, %v397
    %v524 = vpack.c.b16 %v402, %v400
    %v525 = vpack.c.b16 %v403, %v401
    %v526 = vpack.c.b16 %v406, %v404
    %v527 = vpack.c.b16 %v407, %v405
    %v528 = vpack.c.b16 %v410, %v408
    %v529 = vpack.c.b16 %v411, %v409
    %v530 = vpack.c.b16 %v414, %v412
    %v531 = vpack.c.b16 %v415, %v413
    %v532 = vpack.c.b16 %v418, %v416
    %v533 = vpack.c.b16 %v419, %v417
    %v534 = vpack.c.b16 %v422, %v420
    %v535 = vpack.c.b16 %v423, %v421
    %v536 = vpack.c.b16 %v426, %v424
    %v537 = vpack.c.b16 %v427, %v425
    %v538 = vpack.c.b16 %v430, %v428
    %v539 = vpack.c.b16 %v431, %v429
    %v540 = vpack.c.b16 %v434, %v432
    %v541 = vpack.c.b16 %v435, %v433
    %v542 = vpack.c.b16 %v438, %v436
    %v543 = vpack.c.b16 %v439, %v437
    %v544 = vpack.c.b16 %v442, %v440
    %v545 = vpack.c.b16 %v443, %v441
    %v546 = vpack.c.b16 %v446, %v444
    %v547 = vpack.c.b16 %v447, %v445
    %v548 = vpack.c.b16 %v450, %v448
    %v549 = vpack.c.b16 %v451, %v449
    %vm648 = vcmask 130048
    %v650 = vsel %vm648, %v47, 0
    %652 = vmatprep.subr.bf16.mxu0 %v467
    %653 = vmatpush1.bf16.msra.mxu0 %v466
    %654 = vmatprep.subr.bf16.mxu0 %v465
    %655 = vmatpush1.bf16.msra.mxu0 %v464
    %656 = vmatprep.subr.bf16.mxu0 %v463
    %657 = vmatpush1.bf16.msra.mxu0 %v462
    %658 = vmatprep.subr.bf16.mxu0 %v461
    %659 = vmatpush1.bf16.msra.mxu0 %v460
    %660 = vmatprep.subr.bf16.mxu0 %v459
    %661 = vmatpush1.bf16.msra.mxu0 %v458
    %662 = vmatprep.subr.bf16.mxu0 %v457
    %663 = vmatpush1.bf16.msra.mxu0 %v456
    %664 = vmatprep.subr.bf16.mxu0 %v455
    %665 = vmatpush1.bf16.msra.mxu0 %v454
    %666 = vmatprep.subr.bf16.mxu0 %v453
    %667 = vmatpush1.bf16.msra.mxu0 %v452
    %668 = vmatprep.subr.bf16.mxu0 %v483
    %669 = vmatpush2.bf16.msra.mxu0 %v482
    %670 = vmatprep.subr.bf16.mxu0 %v481
    %671 = vmatpush2.bf16.msra.mxu0 %v480
    %672 = vmatprep.subr.bf16.mxu0 %v479
    %673 = vmatpush2.bf16.msra.mxu0 %v478
    %674 = vmatprep.subr.bf16.mxu0 %v477
    %675 = vmatpush2.bf16.msra.mxu0 %v476
    %676 = vmatprep.subr.bf16.mxu0 %v475
    %677 = vmatpush2.bf16.msra.mxu0 %v474
    %678 = vmatprep.subr.bf16.mxu0 %v473
    %679 = vmatpush2.bf16.msra.mxu0 %v472
    %680 = vmatprep.subr.bf16.mxu0 %v471
    %681 = vmatpush2.bf16.msra.mxu0 %v470
    %682 = vmatprep.subr.bf16.mxu0 %v469
    %683 = vmatpush2.bf16.msra.mxu0 %v468
    %684 = vmatprep.mubr.bf16.mxu0 %v42
    %685 = vmatmul.mubr.bf16.gmra.mxu0 %v41
    %v686 = vpop.f32.mrf.mxu0
    %v687 = vadd.f32 %v151, %v686
    %v688 = vpop.f32.mrf.mxu0
    %v689 = vadd.f32 %v155, %v688
    %v690 = vpop.f32.mrf.mxu0
    %v691 = vpop.f32.mrf.mxu0
    %692 = vdwg.mxu0
    %693 = vmatprep.subr.bf16.mxu0 %v499
    %694 = vmatpush1.bf16.msra.mxu0 %v498
    %695 = vmatprep.subr.bf16.mxu0 %v497
    %696 = vmatpush1.bf16.msra.mxu0 %v496
    %697 = vmatprep.subr.bf16.mxu0 %v495
    %698 = vmatpush1.bf16.msra.mxu0 %v494
    %699 = vmatprep.subr.bf16.mxu0 %v493
    %700 = vmatpush1.bf16.msra.mxu0 %v492
    %701 = vmatprep.subr.bf16.mxu0 %v491
    %702 = vmatpush1.bf16.msra.mxu0 %v490
    %703 = vmatprep.subr.bf16.mxu0 %v489
    %704 = vmatpush1.bf16.msra.mxu0 %v488
    %705 = vmatprep.subr.bf16.mxu0 %v487
    %706 = vmatpush1.bf16.msra.mxu0 %v486
    %707 = vmatprep.subr.bf16.mxu0 %v485
    %708 = vmatpush1.bf16.msra.mxu0 %v484
    %709 = vmatprep.subr.bf16.mxu0 %v515
    %710 = vmatpush2.bf16.msra.mxu0 %v514
    %711 = vmatprep.subr.bf16.mxu0 %v513
    %712 = vmatpush2.bf16.msra.mxu0 %v512
    %713 = vmatprep.subr.bf16.mxu0 %v511
    %714 = vmatpush2.bf16.msra.mxu0 %v510
    %715 = vmatprep.subr.bf16.mxu0 %v509
    %716 = vmatpush2.bf16.msra.mxu0 %v508
    %717 = vmatprep.subr.bf16.mxu0 %v507
    %718 = vmatpush2.bf16.msra.mxu0 %v506
    %719 = vmatprep.subr.bf16.mxu0 %v505
    %720 = vmatpush2.bf16.msra.mxu0 %v504
    %721 = vmatprep.subr.bf16.mxu0 %v503
    %722 = vmatpush2.bf16.msra.mxu0 %v502
    %723 = vmatprep.subr.bf16.mxu0 %v501
    %724 = vmatpush2.bf16.msra.mxu0 %v500
    %725 = vmatprep.mubr.bf16.mxu0 %v44
    %726 = vmatmul.mubr.bf16.gmra.mxu0 %v43
    %v727 = vpop.f32.mrf.mxu0
    %v728 = vadd.f32 %v687, %v727
    %v729 = vpop.f32.mrf.mxu0
    %v730 = vadd.f32 %v689, %v729
    %v731 = vpop.f32.mrf.mxu0
    %v732 = vpop.f32.mrf.mxu0
    %733 = vdwg.mxu0
    %734 = vmatprep.subr.bf16.mxu0 %v531
    %735 = vmatpush1.bf16.msra.mxu0 %v530
    %736 = vmatprep.subr.bf16.mxu0 %v529
    %737 = vmatpush1.bf16.msra.mxu0 %v528
    %738 = vmatprep.subr.bf16.mxu0 %v527
    %739 = vmatpush1.bf16.msra.mxu0 %v526
    %740 = vmatprep.subr.bf16.mxu0 %v525
    %741 = vmatpush1.bf16.msra.mxu0 %v524
    %742 = vmatprep.subr.bf16.mxu0 %v523
    %743 = vmatpush1.bf16.msra.mxu0 %v522
    %744 = vmatprep.subr.bf16.mxu0 %v521
    %745 = vmatpush1.bf16.msra.mxu0 %v520
    %746 = vmatprep.subr.bf16.mxu0 %v519
    %747 = vmatpush1.bf16.msra.mxu0 %v518
    %748 = vmatprep.subr.bf16.mxu0 %v517
    %749 = vmatpush1.bf16.msra.mxu0 %v516
    %750 = vmatprep.subr.bf16.mxu0 %v547
    %751 = vmatpush2.bf16.msra.mxu0 %v546
    %752 = vmatprep.subr.bf16.mxu0 %v545
    %753 = vmatpush2.bf16.msra.mxu0 %v544
    %754 = vmatprep.subr.bf16.mxu0 %v543
    %755 = vmatpush2.bf16.msra.mxu0 %v542
    %756 = vmatprep.subr.bf16.mxu0 %v541
    %757 = vmatpush2.bf16.msra.mxu0 %v540
    %758 = vmatprep.subr.bf16.mxu0 %v539
    %759 = vmatpush2.bf16.msra.mxu0 %v538
    %760 = vmatprep.subr.bf16.mxu0 %v537
    %761 = vmatpush2.bf16.msra.mxu0 %v536
    %762 = vmatprep.subr.bf16.mxu0 %v535
    %763 = vmatpush2.bf16.msra.mxu0 %v534
    %764 = vmatprep.subr.bf16.mxu0 %v533
    %765 = vmatpush2.bf16.msra.mxu0 %v532
    %766 = vmatprep.mubr.bf16.mxu0 %v46
    %767 = vmatmul.mubr.bf16.gmra.mxu0 %v45
    %v768 = vpop.f32.mrf.mxu0
    %v769 = vadd.f32 %v728, %v768
    %v770 = vpop.f32.mrf.mxu0
    %v771 = vadd.f32 %v730, %v770
    %v772 = vpop.f32.mrf.mxu0
    %v773 = vpop.f32.mrf.mxu0
    %774 = vdwg.mxu0
    %775 = vmatprep.subr.bf16.mxu0 0
    %776 = vmatpush1.bf16.msra.mxu0 0
    %777 = vmatprep.subr.bf16.mxu0 0
    %778 = vmatpush1.bf16.msra.mxu0 0
    %779 = vmatprep.subr.bf16.mxu0 0
    %780 = vmatpush1.bf16.msra.mxu0 0
    %781 = vmatprep.subr.bf16.mxu0 0
    %782 = vmatpush1.bf16.msra.mxu0 0
    %783 = vmatprep.subr.bf16.mxu0 0
    %784 = vmatpush1.bf16.msra.mxu0 0
    %785 = vmatprep.subr.bf16.mxu0 0
    %786 = vmatpush1.bf16.msra.mxu0 0
    %787 = vmatprep.subr.bf16.mxu0 0
    %788 = vmatpush1.bf16.msra.mxu0 0
    %789 = vmatprep.subr.bf16.mxu0 %v549
    %790 = vmatpush1.bf16.msra.mxu0 %v548
    %791 = vmatprep.subr.bf16.mxu0 0
    %792 = vmatpush2.bf16.msra.mxu0 0
    %793 = vmatprep.subr.bf16.mxu0 0
    %794 = vmatpush2.bf16.msra.mxu0 0
    %795 = vmatprep.subr.bf16.mxu0 0
    %796 = vmatpush2.bf16.msra.mxu0 0
    %797 = vmatprep.subr.bf16.mxu0 0
    %798 = vmatpush2.bf16.msra.mxu0 0
    %799 = vmatprep.subr.bf16.mxu0 0
    %800 = vmatpush2.bf16.msra.mxu0 0
    %801 = vmatprep.subr.bf16.mxu0 0
    %802 = vmatpush2.bf16.msra.mxu0 0
    %803 = vmatprep.subr.bf16.mxu0 0
    %804 = vmatpush2.bf16.msra.mxu0 0
    %805 = vmatprep.subr.bf16.mxu0 0
    %806 = vmatpush2.bf16.msra.mxu0 0
    %807 = vmatprep.mubr.bf16.mxu0 0
    %808 = vmatmul.mubr.bf16.gmra.mxu0 %v650
    %v809 = vpop.f32.mrf.mxu0
    %v810 = vadd.f32 %v769, %v809
    %v811 = vpop.f32.mrf.mxu0
    %v812 = vadd.f32 %v771, %v811
    %v813 = vpop.f32.mrf.mxu0
    %v814 = vpop.f32.mrf.mxu0
    %815 = vdwg.mxu0
    %v816 = vmax.f32 %v810, 0.0
    %v817 = vmax.f32 %v812, 0.0
    %v818 = vpack.c.bf16 %v816, %v816
    %v819 = vpack.c.bf16 %v817, %v817
    %v820 = vld [vmem:[%s3] sm:$0xff]
    %v821 = vld [vmem:[%s3 + $0x8] sm:$0xff]
    %v822 = vld [vmem:[%s3 + $0x10] sm:$0xff]
    %v823 = vld [vmem:[%s3 + $0x18] sm:$0xff]
    %v824 = vld [vmem:[%s3 + $0x20] sm:$0xff]
    %v825 = vld [vmem:[%s3 + $0x28] sm:$0xff]
    %v826 = vld [vmem:[%s3 + $0x30] sm:$0xff]
    %v827 = vld [vmem:[%s3 + $0x38] sm:$0xff]
    %v828 = vld [vmem:[%s3 + $0x40] sm:$0xff]
    %v829 = vld [vmem:[%s3 + $0x48] sm:$0xff]
    %v830 = vld [vmem:[%s3 + $0x50] sm:$0xff]
    %v831 = vld [vmem:[%s3 + $0x58] sm:$0xff]
    %v832 = vld [vmem:[%s3 + $0x60] sm:$0xff]
    %v833 = vld [vmem:[%s3 + $0x68] sm:$0xff]
    %v834 = vld [vmem:[%s3 + $0x70] sm:$0xff]
    %v835 = vld [vmem:[%s3 + $0x78] sm:$0xff]
    %v836 = vld [vmem:[%s3 + $0x80] sm:$0xff]
    %v837 = vld [vmem:[%s3 + $0x88] sm:$0xff]
    %v838 = vld [vmem:[%s3 + $0x90] sm:$0xff]
    %v839 = vld [vmem:[%s3 + $0x98] sm:$0xff]
    %v840 = vld [vmem:[%s3 + $0xa0] sm:$0xff]
    %v841 = vld [vmem:[%s3 + $0xa8] sm:$0xff]
    %v842 = vld [vmem:[%s3 + $0xb0] sm:$0xff]
    %v843 = vld [vmem:[%s3 + $0xb8] sm:$0xff]
    %v844 = vld [vmem:[%s3 + $0xc0] sm:$0xff]
    %v845 = vld [vmem:[%s3 + $0xc8] sm:$0xff]
    %v846 = vld [vmem:[%s3 + $0xd0] sm:$0xff]
    %v847 = vld [vmem:[%s3 + $0xd8] sm:$0xff]
    %v848 = vld [vmem:[%s3 + $0xe0] sm:$0xff]
    %v849 = vld [vmem:[%s3 + $0xe8] sm:$0xff]
    %v850 = vld [vmem:[%s3 + $0xf0] sm:$0xff]
    %v851 = vld [vmem:[%s3 + $0xf8] sm:$0xff]
    %v852 = vld [vmem:[%s4] sm:$0x3]
    %v854 = vlaneseq
    %v855 = vshrl.u32 %v854, 7
    %v856 = vsub.s32 0, %v855
    %v857 = vrot.slane %v852, %v856
    %v858 = vlaneseq
    %v859 = vshrl.u32 %v858, 7
    %v860 = vsub.s32 1, %v859
    %v861 = vrot.slane %v852, %v860
    %v896 = vunpack.c.l.b16 %v820
    %v897 = vunpack.c.h.b16 %v820
    %v898 = vunpack.c.l.b16 %v821
    %v899 = vunpack.c.h.b16 %v821
    %v900 = vunpack.c.l.b16 %v822
    %v901 = vunpack.c.h.b16 %v822
    %v902 = vunpack.c.l.b16 %v823
    %v903 = vunpack.c.h.b16 %v823
    %v904 = vunpack.c.l.b16 %v824
    %v905 = vunpack.c.h.b16 %v824
    %v906 = vunpack.c.l.b16 %v825
    %v907 = vunpack.c.h.b16 %v825
    %v908 = vunpack.c.l.b16 %v826
    %v909 = vunpack.c.h.b16 %v826
    %v910 = vunpack.c.l.b16 %v827
    %v911 = vunpack.c.h.b16 %v827
    %v912 = vunpack.c.l.b16 %v828
    %v913 = vunpack.c.h.b16 %v828
    %v914 = vunpack.c.l.b16 %v829
    %v915 = vunpack.c.h.b16 %v829
    %v916 = vunpack.c.l.b16 %v830
    %v917 = vunpack.c.h.b16 %v830
    %v918 = vunpack.c.l.b16 %v831
    %v919 = vunpack.c.h.b16 %v831
    %v920 = vunpack.c.l.b16 %v832
    %v921 = vunpack.c.h.b16 %v832
    %v922 = vunpack.c.l.b16 %v833
    %v923 = vunpack.c.h.b16 %v833
    %v924 = vunpack.c.l.b16 %v834
    %v925 = vunpack.c.h.b16 %v834
    %v926 = vunpack.c.l.b16 %v835
    %v927 = vunpack.c.h.b16 %v835
    %v928 = vunpack.c.l.b16 %v836
    %v929 = vunpack.c.h.b16 %v836
    %v930 = vunpack.c.l.b16 %v837
    %v931 = vunpack.c.h.b16 %v837
    %v932 = vunpack.c.l.b16 %v838
    %v933 = vunpack.c.h.b16 %v838
    %v934 = vunpack.c.l.b16 %v839
    %v935 = vunpack.c.h.b16 %v839
    %v936 = vunpack.c.l.b16 %v840
    %v937 = vunpack.c.h.b16 %v840
    %v938 = vunpack.c.l.b16 %v841
    %v939 = vunpack.c.h.b16 %v841
    %v940 = vunpack.c.l.b16 %v842
    %v941 = vunpack.c.h.b16 %v842
    %v942 = vunpack.c.l.b16 %v843
    %v943 = vunpack.c.h.b16 %v843
    %v944 = vunpack.c.l.b16 %v844
    %v945 = vunpack.c.h.b16 %v844
    %v946 = vunpack.c.l.b16 %v845
    %v947 = vunpack.c.h.b16 %v845
    %v948 = vunpack.c.l.b16 %v846
    %v949 = vunpack.c.h.b16 %v846
    %v950 = vunpack.c.l.b16 %v847
    %v951 = vunpack.c.h.b16 %v847
    %v952 = vunpack.c.l.b16 %v848
    %v953 = vunpack.c.h.b16 %v848
    %v954 = vunpack.c.l.b16 %v849
    %v955 = vunpack.c.h.b16 %v849
    %v956 = vunpack.c.l.b16 %v850
    %v957 = vunpack.c.h.b16 %v850
    %v958 = vunpack.c.l.b16 %v851
    %v959 = vunpack.c.h.b16 %v851
    %v960 = vpack.c.b16 %v898, %v896
    %v961 = vpack.c.b16 %v899, %v897
    %v962 = vpack.c.b16 %v902, %v900
    %v963 = vpack.c.b16 %v903, %v901
    %v964 = vpack.c.b16 %v906, %v904
    %v965 = vpack.c.b16 %v907, %v905
    %v966 = vpack.c.b16 %v910, %v908
    %v967 = vpack.c.b16 %v911, %v909
    %v968 = vpack.c.b16 %v914, %v912
    %v969 = vpack.c.b16 %v915, %v913
    %v970 = vpack.c.b16 %v918, %v916
    %v971 = vpack.c.b16 %v919, %v917
    %v972 = vpack.c.b16 %v922, %v920
    %v973 = vpack.c.b16 %v923, %v921
    %v974 = vpack.c.b16 %v926, %v924
    %v975 = vpack.c.b16 %v927, %v925
    %v976 = vpack.c.b16 %v930, %v928
    %v977 = vpack.c.b16 %v931, %v929
    %v978 = vpack.c.b16 %v934, %v932
    %v979 = vpack.c.b16 %v935, %v933
    %v980 = vpack.c.b16 %v938, %v936
    %v981 = vpack.c.b16 %v939, %v937
    %v982 = vpack.c.b16 %v942, %v940
    %v983 = vpack.c.b16 %v943, %v941
    %v984 = vpack.c.b16 %v946, %v944
    %v985 = vpack.c.b16 %v947, %v945
    %v986 = vpack.c.b16 %v950, %v948
    %v987 = vpack.c.b16 %v951, %v949
    %v988 = vpack.c.b16 %v954, %v952
    %v989 = vpack.c.b16 %v955, %v953
    %v990 = vpack.c.b16 %v958, %v956
    %v991 = vpack.c.b16 %v959, %v957
    %1024 = vmatprep.subr.bf16.mxu0 %v975
    %1025 = vmatpush1.bf16.msra.mxu0 %v974
    %1026 = vmatprep.subr.bf16.mxu0 %v973
    %1027 = vmatpush1.bf16.msra.mxu0 %v972
    %1028 = vmatprep.subr.bf16.mxu0 %v971
    %1029 = vmatpush1.bf16.msra.mxu0 %v970
    %1030 = vmatprep.subr.bf16.mxu0 %v969
    %1031 = vmatpush1.bf16.msra.mxu0 %v968
    %1032 = vmatprep.subr.bf16.mxu0 %v967
    %1033 = vmatpush1.bf16.msra.mxu0 %v966
    %1034 = vmatprep.subr.bf16.mxu0 %v965
    %1035 = vmatpush1.bf16.msra.mxu0 %v964
    %1036 = vmatprep.subr.bf16.mxu0 %v963
    %1037 = vmatpush1.bf16.msra.mxu0 %v962
    %1038 = vmatprep.subr.bf16.mxu0 %v961
    %1039 = vmatpush1.bf16.msra.mxu0 %v960
    %1040 = vmatprep.subr.bf16.mxu0 %v991
    %1041 = vmatpush2.bf16.msra.mxu0 %v990
    %1042 = vmatprep.subr.bf16.mxu0 %v989
    %1043 = vmatpush2.bf16.msra.mxu0 %v988
    %1044 = vmatprep.subr.bf16.mxu0 %v987
    %1045 = vmatpush2.bf16.msra.mxu0 %v986
    %1046 = vmatprep.subr.bf16.mxu0 %v985
    %1047 = vmatpush2.bf16.msra.mxu0 %v984
    %1048 = vmatprep.subr.bf16.mxu0 %v983
    %1049 = vmatpush2.bf16.msra.mxu0 %v982
    %1050 = vmatprep.subr.bf16.mxu0 %v981
    %1051 = vmatpush2.bf16.msra.mxu0 %v980
    %1052 = vmatprep.subr.bf16.mxu0 %v979
    %1053 = vmatpush2.bf16.msra.mxu0 %v978
    %1054 = vmatprep.subr.bf16.mxu0 %v977
    %1055 = vmatpush2.bf16.msra.mxu0 %v976
    %1056 = vmatprep.mubr.bf16.mxu0 %v819
    %1057 = vmatmul.mubr.bf16.gmra.mxu0 %v818
    %v1058 = vpop.f32.mrf.mxu0
    %v1059 = vadd.f32 %v857, %v1058
    %v1060 = vpop.f32.mrf.mxu0
    %v1061 = vadd.f32 %v861, %v1060
    %v1062 = vpop.f32.mrf.mxu0
    %v1063 = vpop.f32.mrf.mxu0
    %1064 = vdwg.mxu0
    %v1065 = vmax.f32 %v1059, 0.0
    %v1066 = vmax.f32 %v1061, 0.0
    %v1067 = vpack.c.bf16 %v1065, %v1065
    %v1068 = vpack.c.bf16 %v1066, %v1066
    %v1069 = vld [vmem:[%s5] sm:$0xf]
    %v1070 = vld [vmem:[%s5 + $0x4] sm:$0xf]
    %v1071 = vld [vmem:[%s5 + $0x8] sm:$0xf]
    %v1072 = vld [vmem:[%s5 + $0xc] sm:$0xf]
    %v1073 = vld [vmem:[%s5 + $0x10] sm:$0xf]
    %v1074 = vld [vmem:[%s5 + $0x14] sm:$0xf]
    %v1075 = vld [vmem:[%s5 + $0x18] sm:$0xf]
    %v1076 = vld [vmem:[%s5 + $0x1c] sm:$0xf]
    %v1077 = vld [vmem:[%s5 + $0x20] sm:$0xf]
    %v1078 = vld [vmem:[%s5 + $0x24] sm:$0xf]
    %v1079 = vld [vmem:[%s5 + $0x28] sm:$0xf]
    %v1080 = vld [vmem:[%s5 + $0x2c] sm:$0xf]
    %v1081 = vld [vmem:[%s5 + $0x30] sm:$0xf]
    %v1082 = vld [vmem:[%s5 + $0x34] sm:$0xf]
    %v1083 = vld [vmem:[%s5 + $0x38] sm:$0xf]
    %v1084 = vld [vmem:[%s5 + $0x3c] sm:$0xf]
    %v1085 = vld [vmem:[%s5 + $0x40] sm:$0xf]
    %v1086 = vld [vmem:[%s5 + $0x44] sm:$0xf]
    %v1087 = vld [vmem:[%s5 + $0x48] sm:$0xf]
    %v1088 = vld [vmem:[%s5 + $0x4c] sm:$0xf]
    %v1089 = vld [vmem:[%s5 + $0x50] sm:$0xf]
    %v1090 = vld [vmem:[%s5 + $0x54] sm:$0xf]
    %v1091 = vld [vmem:[%s5 + $0x58] sm:$0xf]
    %v1092 = vld [vmem:[%s5 + $0x5c] sm:$0xf]
    %v1093 = vld [vmem:[%s5 + $0x60] sm:$0xf]
    %v1094 = vld [vmem:[%s5 + $0x64] sm:$0xf]
    %v1095 = vld [vmem:[%s5 + $0x68] sm:$0xf]
    %v1096 = vld [vmem:[%s5 + $0x6c] sm:$0xf]
    %v1097 = vld [vmem:[%s5 + $0x70] sm:$0xf]
    %v1098 = vld [vmem:[%s5 + $0x74] sm:$0xf]
    %v1099 = vld [vmem:[%s5 + $0x78] sm:$0xf]
    %v1100 = vld [vmem:[%s5 + $0x7c] sm:$0xf]
    %v1101 = vld [vmem:[%s6] sm:$0x1]
    %v1103 = vlaneseq
    %v1104 = vshrl.u32 %v1103, 7
    %v1105 = vsub.s32 0, %v1104
    %v1106 = vrot.slane %v1101, %v1105
    %v1140 = vunpack.c.l.b16 %v1069
    %v1141 = vunpack.c.l.b16 %v1070
    %v1142 = vunpack.c.l.b16 %v1071
    %v1143 = vunpack.c.l.b16 %v1072
    %v1144 = vunpack.c.l.b16 %v1073
    %v1145 = vunpack.c.l.b16 %v1074
    %v1146 = vunpack.c.l.b16 %v1075
    %v1147 = vunpack.c.l.b16 %v1076
    %v1148 = vunpack.c.l.b16 %v1077
    %v1149 = vunpack.c.l.b16 %v1078
    %v1150 = vunpack.c.l.b16 %v1079
    %v1151 = vunpack.c.l.b16 %v1080
    %v1152 = vunpack.c.l.b16 %v1081
    %v1153 = vunpack.c.l.b16 %v1082
    %v1154 = vunpack.c.l.b16 %v1083
    %v1155 = vunpack.c.l.b16 %v1084
    %v1156 = vunpack.c.l.b16 %v1085
    %v1157 = vunpack.c.l.b16 %v1086
    %v1158 = vunpack.c.l.b16 %v1087
    %v1159 = vunpack.c.l.b16 %v1088
    %v1160 = vunpack.c.l.b16 %v1089
    %v1161 = vunpack.c.l.b16 %v1090
    %v1162 = vunpack.c.l.b16 %v1091
    %v1163 = vunpack.c.l.b16 %v1092
    %v1164 = vunpack.c.l.b16 %v1093
    %v1165 = vunpack.c.l.b16 %v1094
    %v1166 = vunpack.c.l.b16 %v1095
    %v1167 = vunpack.c.l.b16 %v1096
    %v1168 = vunpack.c.l.b16 %v1097
    %v1169 = vunpack.c.l.b16 %v1098
    %v1170 = vunpack.c.l.b16 %v1099
    %v1171 = vunpack.c.l.b16 %v1100
    %v1172 = vpack.c.b16 %v1141, %v1140
    %v1173 = vpack.c.b16 %v1143, %v1142
    %v1174 = vpack.c.b16 %v1145, %v1144
    %v1175 = vpack.c.b16 %v1147, %v1146
    %v1176 = vpack.c.b16 %v1149, %v1148
    %v1177 = vpack.c.b16 %v1151, %v1150
    %v1178 = vpack.c.b16 %v1153, %v1152
    %v1179 = vpack.c.b16 %v1155, %v1154
    %v1180 = vpack.c.b16 %v1157, %v1156
    %v1181 = vpack.c.b16 %v1159, %v1158
    %v1182 = vpack.c.b16 %v1161, %v1160
    %v1183 = vpack.c.b16 %v1163, %v1162
    %v1184 = vpack.c.b16 %v1165, %v1164
    %v1185 = vpack.c.b16 %v1167, %v1166
    %v1186 = vpack.c.b16 %v1169, %v1168
    %v1187 = vpack.c.b16 %v1171, %v1170
    %1204 = vmatprep.subr.bf16.mxu0 0
    %1205 = vmatpush1.bf16.msra.mxu0 %v1179
    %1206 = vmatprep.subr.bf16.mxu0 0
    %1207 = vmatpush1.bf16.msra.mxu0 %v1178
    %1208 = vmatprep.subr.bf16.mxu0 0
    %1209 = vmatpush1.bf16.msra.mxu0 %v1177
    %1210 = vmatprep.subr.bf16.mxu0 0
    %1211 = vmatpush1.bf16.msra.mxu0 %v1176
    %1212 = vmatprep.subr.bf16.mxu0 0
    %1213 = vmatpush1.bf16.msra.mxu0 %v1175
    %1214 = vmatprep.subr.bf16.mxu0 0
    %1215 = vmatpush1.bf16.msra.mxu0 %v1174
    %1216 = vmatprep.subr.bf16.mxu0 0
    %1217 = vmatpush1.bf16.msra.mxu0 %v1173
    %1218 = vmatprep.subr.bf16.mxu0 0
    %1219 = vmatpush1.bf16.msra.mxu0 %v1172
    %1220 = vmatprep.subr.bf16.mxu0 0
    %1221 = vmatpush2.bf16.msra.mxu0 %v1187
    %1222 = vmatprep.subr.bf16.mxu0 0
    %1223 = vmatpush2.bf16.msra.mxu0 %v1186
    %1224 = vmatprep.subr.bf16.mxu0 0
    %1225 = vmatpush2.bf16.msra.mxu0 %v1185
    %1226 = vmatprep.subr.bf16.mxu0 0
    %1227 = vmatpush2.bf16.msra.mxu0 %v1184
    %1228 = vmatprep.subr.bf16.mxu0 0
    %1229 = vmatpush2.bf16.msra.mxu0 %v1183
    %1230 = vmatprep.subr.bf16.mxu0 0
    %1231 = vmatpush2.bf16.msra.mxu0 %v1182
    %1232 = vmatprep.subr.bf16.mxu0 0
    %1233 = vmatpush2.bf16.msra.mxu0 %v1181
    %1234 = vmatprep.subr.bf16.mxu0 0
    %1235 = vmatpush2.bf16.msra.mxu0 %v1180
    %1236 = vmatprep.mubr.bf16.mxu0 %v1068
    %1237 = vmatmul.mubr.bf16.gmra.mxu0 %v1067
    %v1238 = vpop.f32.mrf.mxu0
    %v1239 = vadd.f32 %v1106, %v1238
    %v1240 = vpop.f32.mrf.mxu0
    %v1241 = vpop.f32.mrf.mxu0
    %v1242 = vpop.f32.mrf.mxu0
    %1243 = vdwg.mxu0
    %v1244 = vmax.f32 %v1239, 0.0
    %v1245 = vpack.c.bf16 %v1244, %v1244
    %v1246 = vld [vmem:[%s7] sm:$0xf]
    %v1247 = vld [vmem:[%s7 + $0x4] sm:$0xf]
    %v1248 = vld [vmem:[%s7 + $0x8] sm:$0xf]
    %v1249 = vld [vmem:[%s7 + $0xc] sm:$0xf]
    %v1250 = vld [vmem:[%s7 + $0x10] sm:$0xf]
    %v1251 = vld [vmem:[%s7 + $0x14] sm:$0xf]
    %v1252 = vld [vmem:[%s7 + $0x18] sm:$0xf]
    %v1253 = vld [vmem:[%s7 + $0x1c] sm:$0xf]
    %v1254 = vld [vmem:[%s8] sm:$0x1]
    %v1256 = vlaneseq
    %v1257 = vshrl.u32 %v1256, 7
    %v1258 = vsub.s32 0, %v1257
    %v1259 = vrot.slane %v1254, %v1258
    %v1269 = vunpack.c.l.b16 %v1246
    %v1270 = vunpack.c.l.b16 %v1247
    %v1271 = vunpack.c.l.b16 %v1248
    %v1272 = vunpack.c.l.b16 %v1249
    %v1273 = vunpack.c.l.b16 %v1250
    %v1274 = vunpack.c.l.b16 %v1251
    %v1275 = vunpack.c.l.b16 %v1252
    %v1276 = vunpack.c.l.b16 %v1253
    %v1277 = vpack.c.b16 %v1270, %v1269
    %v1278 = vpack.c.b16 %v1272, %v1271
    %v1279 = vpack.c.b16 %v1274, %v1273
    %v1280 = vpack.c.b16 %v1276, %v1275
    %vm1285 = vcmask 523264
    %v1287 = vsel %vm1285, %v1245, 0
    %1289 = vmatprep.subr.bf16.mxu0 0
    %1290 = vmatpush1.bf16.msra.mxu0 0
    %1291 = vmatprep.subr.bf16.mxu0 0
    %1292 = vmatpush1.bf16.msra.mxu0 0
    %1293 = vmatprep.subr.bf16.mxu0 0
    %1294 = vmatpush1.bf16.msra.mxu0 0
    %1295 = vmatprep.subr.bf16.mxu0 0
    %1296 = vmatpush1.bf16.msra.mxu0 0
    %1297 = vmatprep.subr.bf16.mxu0 0
    %1298 = vmatpush1.bf16.msra.mxu0 %v1280
    %1299 = vmatprep.subr.bf16.mxu0 0
    %1300 = vmatpush1.bf16.msra.mxu0 %v1279
    %1301 = vmatprep.subr.bf16.mxu0 0
    %1302 = vmatpush1.bf16.msra.mxu0 %v1278
    %1303 = vmatprep.subr.bf16.mxu0 0
    %1304 = vmatpush1.bf16.msra.mxu0 %v1277
    %1305 = vmatprep.subr.bf16.mxu0 0
    %1306 = vmatpush2.bf16.msra.mxu0 0
    %1307 = vmatprep.subr.bf16.mxu0 0
    %1308 = vmatpush2.bf16.msra.mxu0 0
    %1309 = vmatprep.subr.bf16.mxu0 0
    %1310 = vmatpush2.bf16.msra.mxu0 0
    %1311 = vmatprep.subr.bf16.mxu0 0
    %1312 = vmatpush2.bf16.msra.mxu0 0
    %1313 = vmatprep.subr.bf16.mxu0 0
    %1314 = vmatpush2.bf16.msra.mxu0 0
    %1315 = vmatprep.subr.bf16.mxu0 0
    %1316 = vmatpush2.bf16.msra.mxu0 0
    %1317 = vmatprep.subr.bf16.mxu0 0
    %1318 = vmatpush2.bf16.msra.mxu0 0
    %1319 = vmatprep.subr.bf16.mxu0 0
    %1320 = vmatpush2.bf16.msra.mxu0 0
    %1321 = vmatprep.mubr.bf16.mxu0 0
    %1322 = vmatmul.mubr.bf16.gmra.mxu0 %v1287
    %v1323 = vpop.f32.mrf.mxu0
    %v1324 = vadd.f32 %v1259, %v1323
    %v1325 = vpop.f32.mrf.mxu0
    %v1326 = vpop.f32.mrf.mxu0
    %v1327 = vpop.f32.mrf.mxu0
    %1328 = vdwg.mxu0
    %1329 = vmax.xlane.f32.xlu0 %v1324
    %v1330 = vpop.xlane.xlu0 %1329
    %v1331 = vsub.f32 %v1324, %v1330
    %v1332 = vmul.f32 %v1331, 1.442695
    %v1333 = vpow.pop %v1332
    %1334 = vadd.xlane.f32.xlu0 %v1333
    %v1335 = vpop.xlane.xlu0 %1334
    %v1336 = vlog2.pop %v1335
    %v1337 = vmul.f32 %v1336, 0.6931472
    %v1338 = vsub.f32 %v1331, %v1337
    %1339 = vst [vmem:[#allocation2] sm:$0xff] %v1338
    // Predicated region
    $region38: #{mlpnet_forward.1} parent=1 // pred_check
      _
    $region39: #{mlpnet_forward.1} parent=1 // pred_check_branch
      %1341 = sbr.rel (0) target = $region41
    $region40: #{mlpnet_forward.1} parent=1 // pred_region
      %s1343 = ssub.s32 128, 128
      %1344 = vsyncadd [#allocation3], %s1343
      %s1346 = sshll.u32 [#allocation2], 4
      %s1347 = int_to_ptr.vmem [resolvable:$true] %s1346
      %1349 = dma.vmem_to_hbm [thread:$0]  %s1347, 128, %s9, [#allocation3]
    $region41: #{mlpnet_forward.1} parent=1 // pred_fallthru
      _
    // Predicated region
    $region42: #{mlpnet_forward.1} parent=1 // pred_check
      _
    $region43: #{mlpnet_forward.1} parent=1 // pred_check_branch
      %1351 = sbr.rel (0) target = $region45
    $region44: #{mlpnet_forward.1} parent=1 // pred_region
      %1352 = dma.done [#allocation3], 128
    $region45: #{mlpnet_forward.1} parent=1 // pred_fallthru
      _
    %1353 = vsyncpa [#allocation3], 1

</llo_original>
